<compile_context>
chip_gen: v6e
topology: v6e:2x2x1
jax: 0.10.0
libtpu: 0.0.40
codegen_flags: <defaults>
</compile_context>

<pallas_src>
import functools

import jax
import jax.numpy as jnp
from jax.experimental import pallas as pl
from jax.experimental.pallas import tpu as pltpu


def _attention_gate_kernel(g_ref, x_ref, wg_ref, wx_ref, wpsi_ref, o_ref):
    """One (batch-chunk, spatial-tile) block of the attention gate.

    Layout: channels on sublanes, flattened spatial (H*W) on lanes.

    g_ref    : (NB, F_g,  TS)   gating-signal block
    x_ref    : (NB, F_l,  TS)   skip-feature block
    wg_ref   : (F_int, F_g)     W_g 1x1-conv weight
    wx_ref   : (F_int, F_l)     W_x 1x1-conv weight
    wpsi_ref : (1, F_int)       psi 1x1-conv weight
    o_ref    : (NB, F_l,  TS)   gated output block
    """
    wg = wg_ref[...]
    wx = wx_ref[...]
    wpsi = wpsi_ref[...]

    nb = g_ref.shape[0]
    # Short, static unroll over the folded batch elements (NB is small by
    # construction); each iteration is a lane-dense 2-D problem.
    for b in range(nb):
        g = g_ref[b]                                   # (F_g, TS)
        x = x_ref[b]                                   # (F_l, TS)

        # 1x1 convolutions == channel matmuls on the MXU; weights are already
        # oriented so no in-kernel transpose is needed. f32 accumulation.
        g1 = jnp.dot(wg, g, preferred_element_type=jnp.float32)
        x1 = jnp.dot(wx, x, preferred_element_type=jnp.float32)
        s = jnp.maximum(g1 + x1, 0.0)                  # ReLU, (F_int, TS)

        a = jnp.dot(wpsi, s, preferred_element_type=jnp.float32)
        a = jax.nn.sigmoid(a)                          # (1, TS)

        # Broadcast multiply over the channel (sublane) axis; lane-dense store.
        o_ref[b] = (x.astype(jnp.float32) * a).astype(o_ref.dtype)


def _step_vmem_bytes(nb, ts, f_g, f_l, f_int, itemsize):
    """Rough per-grid-step VMEM working set (double-buffered I/O + f32 temps)."""
    io = 2 * (f_g + 2 * f_l) * nb * ts * itemsize        # 2x = double buffering
    interm = (3 * f_int + 4) * nb * ts * 4               # g1/x1/s/a f32 temporaries
    return io + interm


def _select_tiling(n, hw, f_g, f_l, f_int, itemsize, target_lanes, vmem_budget):
    """Pick (nb, ts): batch-fold count and spatial lane tile."""
    target_lanes = max(128, int(target_lanes))

    if hw <= target_lanes:
        # Whole spatial extent in one tile (full-dim block is always legal);
        # fold batch elements to keep bytes-per-step large.
        ts = hw
        nb = max(1, min(n, target_lanes // max(hw, 1)))
    else:
        ts = max(128, (target_lanes // 128) * 128)        # lane-dense tile
        nb = 1

    # Shrink until the working set fits the (v7x-safe) VMEM budget.
    while _step_vmem_bytes(nb, ts, f_g, f_l, f_int, itemsize) > vmem_budget:
        if nb > 1:
            nb = (nb + 1) // 2
        elif ts >= 256:
            ts = max(128, ((ts // 2) // 128) * 128)
        else:
            break

    # Megacore guard: ensure >= 2 parallel grid steps when possible so both
    # v7x TensorCores get work (harmless on single-TC v5e/v6e).
    if pl.cdiv(n, nb) == 1 and pl.cdiv(hw, ts) == 1:
        if n >= 2:
            nb = pl.cdiv(n, 2)
        elif hw >= 256:
            ts = max(128, (pl.cdiv(hw, 2) // 128) * 128)

    return nb, ts


@functools.partial(jax.jit, static_argnames=("tile_s",))
def attention_gate(g, x, w_g, w_x, w_psi, *, tile_s=8192):
    """AttentionGate forward. g: (N, F_g, H, W), x: (N, F_l, H, W) — NCHW.

    w_g   : (F_int, F_g)   (PyTorch Conv2d weight (F_int, F_g, 1, 1) squeezed)
    w_x   : (F_int, F_l)
    w_psi : (1, F_int)
    Returns (N, F_l, H, W) in x.dtype. Pass bf16 g/x for a bandwidth-bound
    ~2x win (math stays f32 inside the kernel).
    """
    n, f_g, h, w = g.shape
    nx, f_l, hx, wx_ = x.shape
    assert (n, h, w) == (nx, hx, wx_), (
        "AttentionGate expects g and x at identical batch/spatial size")
    f_int = w_g.shape[0]
    assert w_g.shape == (f_int, f_g)
    assert w_x.shape == (f_int, f_l)
    assert w_psi.shape == (1, f_int)
    hw = h * w

    # Free reshape: NCHW is contiguous over (H, W), so merging them costs
    # nothing — no transpose, no pad, no extra HBM traffic.
    g3 = g.reshape(n, f_g, hw)
    x3 = x.reshape(n, f_l, hw)

    itemsize = max(x.dtype.itemsize, g.dtype.itemsize)
    vmem_budget = 20 * 1024 * 1024          # block working set; v7x-safe
    nb, ts = _select_tiling(n, hw, f_g, f_l, f_int, itemsize, tile_s,
                            vmem_budget)
    grid = (pl.cdiv(n, nb), pl.cdiv(hw, ts))

    cost = pl.CostEstimate(
        flops=2 * f_int * (f_g + f_l + 1) * n * hw + 4 * f_l * n * hw,
        transcendentals=n * hw,
        bytes_accessed=((f_g + 2 * f_l) * n * hw * itemsize
                        + 4 * (f_int * (f_g + f_l) + f_int)),
    )

    out3 = pl.pallas_call(
        _attention_gate_kernel,
        out_shape=jax.ShapeDtypeStruct((n, f_l, hw), x.dtype),
        grid_spec=pltpu.PrefetchScalarGridSpec(
            num_scalar_prefetch=0,
            grid=grid,
            in_specs=[
                pl.BlockSpec((nb, f_g, ts), lambda b, s: (b, 0, s)),
                pl.BlockSpec((nb, f_l, ts), lambda b, s: (b, 0, s)),
                pl.BlockSpec((f_int, f_g), lambda b, s: (0, 0)),
                pl.BlockSpec((f_int, f_l), lambda b, s: (0, 0)),
                pl.BlockSpec((1, f_int), lambda b, s: (0, 0)),
            ],
            out_specs=pl.BlockSpec((nb, f_l, ts), lambda b, s: (b, 0, s)),
        ),
        compiler_params=pltpu.CompilerParams(
            dimension_semantics=("parallel", "parallel"),
            vmem_limit_bytes=32 * 1024 * 1024,
        ),
        cost_estimate=cost,
    )(g3, x3, w_g, w_x, w_psi)

    return out3.reshape(n, f_l, h, w)


def _reference(g, x, w_g, w_x, w_psi):
    """Pure-JAX reference matching the PyTorch forward (NCHW, 1x1 convs)."""
    g1 = jnp.einsum("nchw,oc->nohw", g, w_g)
    x1 = jnp.einsum("nchw,oc->nohw", x, w_x)
    psi = jax.nn.sigmoid(
        jnp.einsum("nchw,oc->nohw", jnp.maximum(g1 + x1, 0.0), w_psi))
    return x * psi


if __name__ == "__main__":
    # Small shapes consistent with the module: F_g=F_l=4, F_int=8, N=2, H=W=16.
    N, F_g, F_l, F_int, H, W = 2, 4, 4, 8, 16, 16

    key = jax.random.PRNGKey(0)
    kg, kx, kwg, kwx, kwp = jax.random.split(key, 5)

    g = jax.random.normal(kg, (N, F_g, H, W), dtype=jnp.float32)
    x = jax.random.normal(kx, (N, F_l, H, W), dtype=jnp.float32)

    # Deterministic synthetic weights (Conv2d 1x1 weights squeezed to 2-D).
    w_g = jax.random.normal(kwg, (F_int, F_g), dtype=jnp.float32) * 0.1
    w_x = jax.random.normal(kwx, (F_int, F_l), dtype=jnp.float32) * 0.1
    w_psi = jax.random.normal(kwp, (1, F_int), dtype=jnp.float32) * 0.1

    out = attention_gate(g, x, w_g, w_x, w_psi)
    out = jax.block_until_ready(out)

    ref = _reference(g, x, w_g, w_x, w_psi)
    assert out.shape == (N, F_l, H, W)
    assert jnp.allclose(out, ref, atol=1e-5, rtol=1e-5), "mismatch vs reference"

    print("KERNEL_OK")
</pallas_src>

<mosaic_0001>
module attributes {stable_mosaic.version = 11 : i64} {
  func.func @_attention_gate_kernel(%arg0: i32, %arg1: i32, %arg2: memref<1x4x256xf32, #tpu.memory_space<vmem>>, %arg3: memref<1x4x256xf32, #tpu.memory_space<vmem>>, %arg4: memref<8x4xf32, #tpu.memory_space<vmem>>, %arg5: memref<8x4xf32, #tpu.memory_space<vmem>>, %arg6: memref<1x8xf32, #tpu.memory_space<vmem>>, %arg7: memref<1x4x256xf32, #tpu.memory_space<vmem>>) attributes {dimension_semantics = [#tpu.dimension_semantics<parallel>, #tpu.dimension_semantics<parallel>], iteration_bounds = array<i64: 2, 1>, scalar_prefetch = 0 : i64, scratch_operands = 0 : i64, tpu.core_type = #tpu.core_type<tc>, window_params = [{transform_indices = @transform_0, window_bounds = array<i64: 1, 4, 256>}, {transform_indices = @transform_1, window_bounds = array<i64: 1, 4, 256>}, {pipeline_mode = #tpu.pipeline_mode<synchronous>, transform_indices = @transform_2, window_bounds = array<i64: 8, 4>}, {pipeline_mode = #tpu.pipeline_mode<synchronous>, transform_indices = @transform_3, window_bounds = array<i64: 8, 4>}, {pipeline_mode = #tpu.pipeline_mode<synchronous>, transform_indices = @transform_4, window_bounds = array<i64: 1, 8>}, {transform_indices = @transform_5, window_bounds = array<i64: 1, 4, 256>}]} {
    %c0 = arith.constant 0 : index
    %c0_0 = arith.constant 0 : index
    %0 = vector.load %arg4[%c0, %c0_0] : memref<8x4xf32, #tpu.memory_space<vmem>>, vector<8x4xf32>
    %c0_1 = arith.constant 0 : index
    %c0_2 = arith.constant 0 : index
    %1 = vector.load %arg5[%c0_1, %c0_2] : memref<8x4xf32, #tpu.memory_space<vmem>>, vector<8x4xf32>
    %c0_3 = arith.constant 0 : index
    %c0_4 = arith.constant 0 : index
    %2 = vector.load %arg6[%c0_3, %c0_4] : memref<1x8xf32, #tpu.memory_space<vmem>>, vector<1x8xf32>
    %c0_5 = arith.constant 0 : index
    %c0_6 = arith.constant 0 : index
    %c0_7 = arith.constant 0 : index
    %3 = vector.load %arg2[%c0_5, %c0_6, %c0_7] : memref<1x4x256xf32, #tpu.memory_space<vmem>>, vector<1x4x256xf32>
    %4 = vector.shape_cast %3 : vector<1x4x256xf32> to vector<4x256xf32>
    %c0_8 = arith.constant 0 : index
    %c0_9 = arith.constant 0 : index
    %c0_10 = arith.constant 0 : index
    %5 = vector.load %arg3[%c0_8, %c0_9, %c0_10] : memref<1x4x256xf32, #tpu.memory_space<vmem>>, vector<1x4x256xf32>
    %6 = vector.shape_cast %5 : vector<1x4x256xf32> to vector<4x256xf32>
    %cst = arith.constant dense<0.000000e+00> : vector<8x256xf32>
    %7 = tpu.matmul %0, %4, %cst {dimension_numbers = #tpu.dot_dimension_numbers<[1], [0], [0], [1], [0, 0, 1, 1], [], []>} : vector<8x4xf32>, vector<4x256xf32>, vector<8x256xf32> -> vector<8x256xf32>
    %cst_11 = arith.constant dense<0.000000e+00> : vector<8x256xf32>
    %8 = tpu.matmul %1, %6, %cst_11 {dimension_numbers = #tpu.dot_dimension_numbers<[1], [0], [0], [1], [0, 0, 1, 1], [], []>} : vector<8x4xf32>, vector<4x256xf32>, vector<8x256xf32> -> vector<8x256xf32>
    %9 = arith.addf %7, %8 : vector<8x256xf32>
    %cst_12 = arith.constant 0.000000e+00 : f32
    %10 = vector.broadcast %cst_12 : f32 to vector<8x256xf32>
    %11 = arith.maximumf %9, %10 : vector<8x256xf32>
    %cst_13 = arith.constant dense<0.000000e+00> : vector<1x256xf32>
    %12 = tpu.matmul %2, %11, %cst_13 {dimension_numbers = #tpu.dot_dimension_numbers<[1], [0], [0], [1], [0, 0, 1, 1], [], []>} : vector<1x8xf32>, vector<8x256xf32>, vector<1x256xf32> -> vector<1x256xf32>
    %13 = arith.negf %12 : vector<1x256xf32>
    %14 = math.exp %13 : vector<1x256xf32>
    %cst_14 = arith.constant 1.000000e+00 : f32
    %15 = vector.broadcast %cst_14 : f32 to vector<1x256xf32>
    %16 = arith.addf %15, %14 : vector<1x256xf32>
    %17 = arith.divf %15, %16 : vector<1x256xf32>
    %18 = vector.broadcast %17 : vector<1x256xf32> to vector<4x256xf32>
    %19 = arith.mulf %6, %18 : vector<4x256xf32>
    %c0_15 = arith.constant 0 : index
    %c0_16 = arith.constant 0 : index
    %c0_17 = arith.constant 0 : index
    %20 = vector.load %arg7[%c0_15, %c0_16, %c0_17] : memref<1x4x256xf32, #tpu.memory_space<vmem>>, vector<1x4x256xf32>
    %21 = vector.shape_cast %20 : vector<1x4x256xf32> to vector<4x256xf32>
    %22 = vector.shape_cast %19 : vector<4x256xf32> to vector<1x4x256xf32>
    tpu.vector_store %arg7[%c0_15, %c0_16, %c0_17], %22 {strides = array<i32>} : memref<1x4x256xf32, #tpu.memory_space<vmem>>, vector<1x4x256xf32>,
    return
  }
  func.func @transform_0(%arg0: i32, %arg1: i32) -> (i32, i32, i32) {
    %c0_i32 = arith.constant 0 : i32
    %c0_i32_0 = arith.constant 0 : i32
    return %arg0, %c0_i32, %arg1 : i32, i32, i32
  }
  func.func @transform_1(%arg0: i32, %arg1: i32) -> (i32, i32, i32) {
    %c0_i32 = arith.constant 0 : i32
    %c0_i32_0 = arith.constant 0 : i32
    return %arg0, %c0_i32, %arg1 : i32, i32, i32
  }
  func.func @transform_2(%arg0: i32, %arg1: i32) -> (i32, i32) {
    %c0_i32 = arith.constant 0 : i32
    %c0_i32_0 = arith.constant 0 : i32
    %c0_i32_1 = arith.constant 0 : i32
    return %c0_i32, %c0_i32_0 : i32, i32
  }
  func.func @transform_3(%arg0: i32, %arg1: i32) -> (i32, i32) {
    %c0_i32 = arith.constant 0 : i32
    %c0_i32_0 = arith.constant 0 : i32
    %c0_i32_1 = arith.constant 0 : i32
    return %c0_i32, %c0_i32_0 : i32, i32
  }
  func.func @transform_4(%arg0: i32, %arg1: i32) -> (i32, i32) {
    %c0_i32 = arith.constant 0 : i32
    %c0_i32_0 = arith.constant 0 : i32
    %c0_i32_1 = arith.constant 0 : i32
    return %c0_i32, %c0_i32_0 : i32, i32
  }
  func.func @transform_5(%arg0: i32, %arg1: i32) -> (i32, i32, i32) {
    %c0_i32 = arith.constant 0 : i32
    %c0_i32_0 = arith.constant 0 : i32
    return %arg0, %c0_i32, %arg1 : i32, i32, i32
  }
}

</mosaic_0001>

<llo_original>
// kernel: attention_gate.1
$region0: #{attention_gate.1}
  #allocation0 [shape = 'u32[]', space=smem, size = 0x4, offset = 0x4, fixed_abs, tag = 'smem constant byte address 0x4 - core index']
  #allocation1 [shape = 'u32[144,128]{1,0:T(1,128)}', space=vmem, size = 0x12000, scoped, tag = 'internal scratch']
  %s0 = inlined_call_operand.vmem [shape: f32[2,4,256], index: 0, kind: input, shape index: {}]
  %s1 = inlined_call_operand.vmem [shape: f32[2,4,256], index: 1, kind: input, shape index: {}]
  %s2 = inlined_call_operand.vmem [shape: f32[8,4], index: 2, kind: input, shape index: {}]
  %s3 = inlined_call_operand.vmem [shape: f32[8,4], index: 3, kind: input, shape index: {}]
  %s4 = inlined_call_operand.vmem [shape: f32[1,8], index: 4, kind: input, shape index: {}]
  %s5 = inlined_call_operand.vmem [shape: f32[2,4,256], index: 5, kind: output, shape index: {}]
  %s6 = sld [smem:[#allocation0]]
  $region53: #{attention_gate.1} parent=0
    _
  %s8 = ssub.s32 1, %s6
  %s9 = scalar_select 0, %s8, %s6
  loop: start=0, step=1, limit=4
  $region2: #{attention_gate.1} parent=0 // loop_pre_header
    _
  $region3: #{attention_gate.1} parent=0 // loop_header
    %s11 = sphi 0, %s15
    %p12 = scmp.ge.s32.totalorder %s11, 4
    %s18 = sphi 0, %s30
    %s19 = sphi 0, %s26
    %s20 = sphi 0, %s18
    %s21 = sphi 0, %s19
    %s22 = sphi 0, %s20
    %s23 = sphi 0, %s21
    %s35 = sphi 0, %s37
    %s38 = sphi 0, %s35
    %s39 = sphi 0, %s38
    %s55 = sphi 0, %s39
    %s63 = sphi 0, %s65
    %s66 = sphi 0, %s63
    %s67 = sphi 0, %s66
    %s83 = sphi 0, %s67
    %s87 = sphi 0, %s87
    %s89 = sphi 0, %s87
    %s90 = sphi 0, %s89
    %s104 = sphi 0, %s90
    %s108 = sphi 0, %s108
    %s110 = sphi 0, %s108
    %s111 = sphi 0, %s110
    %s125 = sphi 0, %s111
    %s129 = sphi 0, %s129
    %s131 = sphi 0, %s129
    %s132 = sphi 0, %s131
    %s146 = sphi 0, %s132
    %s154 = sphi 0, %s156
    %s157 = sphi 0, %s154
    %s158 = sphi 0, %s157
    %s174 = sphi 0, %s158
  $region4: #{attention_gate.1} parent=0 // loop_header_branch
    %14 = sbr.rel (%p12) target = $region8
  $region5: #{attention_gate.1} parent=0 // loop_body
    %s16 = ssub.s32 %s11, 1
    %s17 = ssub.s32 %s11, 2
    %s24 = sadd.s32 1, %s19
    %p25 = scmp.ge.s32.totalorder %s24, 1
    %s26 = scalar_select %p25, 0, %s24
    %s27 = sadd.s32 1, %s18
    %s28 = scalar_select %p25, %s27, %s18
    %p29 = scmp.ge.s32.totalorder %s28, 2
    %s30 = scalar_select %p29, 0, %s28
    %s31 = ssub.s32 %s18, %s30
    %s32 = ssub.s32 %s19, %s26
    %s33 = sor.u32 %s31, %s32
    %p34 = scmp.eq.s32.totalorder %s33, 0
    %s36 = sadd.s32 %s35, 1
    %s37 = scalar_select %p34, %s35, %s36
    %p40 = pneg %p34
    %p41 = scmp.eq.s32.totalorder %s11, 1
    %p42 = por %p40, %p41
    %p43 = scmp.ne.s32.totalorder %s35, %s38
    %p44 = scmp.eq.s32.totalorder %s11, 0
    %p45 = por %p43, %p44
    %p46 = scmp.ne.s32.totalorder %s35, %s38
    %p47 = scmp.eq.s32.totalorder %s16, 1
    %p48 = por %p46, %p47
    %p49 = scmp.ne.s32.totalorder %s38, %s39
    %p50 = scmp.eq.s32.totalorder %s16, 0
    %p51 = por %p49, %p50
    %p52 = scmp.ne.s32.totalorder %s38, %s39
    %p53 = scmp.eq.s32.totalorder %s17, 1
    %p54 = por %p52, %p53
    %p56 = scmp.ne.s32.totalorder %s39, %s55
    %p57 = scmp.eq.s32.totalorder %s17, 0
    %p58 = por %p56, %p57
    %s59 = ssub.s32 %s18, %s30
    %s60 = ssub.s32 %s19, %s26
    %s61 = sor.u32 %s59, %s60
    %p62 = scmp.eq.s32.totalorder %s61, 0
    %s64 = sadd.s32 %s63, 1
    %s65 = scalar_select %p62, %s63, %s64
    %p68 = pneg %p62
    %p69 = scmp.eq.s32.totalorder %s11, 1
    %p70 = por %p68, %p69
    %p71 = scmp.ne.s32.totalorder %s63, %s66
    %p72 = scmp.eq.s32.totalorder %s11, 0
    %p73 = por %p71, %p72
    %p74 = scmp.ne.s32.totalorder %s63, %s66
    %p75 = scmp.eq.s32.totalorder %s16, 1
    %p76 = por %p74, %p75
    %p77 = scmp.ne.s32.totalorder %s66, %s67
    %p78 = scmp.eq.s32.totalorder %s16, 0
    %p79 = por %p77, %p78
    %p80 = scmp.ne.s32.totalorder %s66, %s67
    %p81 = scmp.eq.s32.totalorder %s17, 1
    %p82 = por %p80, %p81
    %p84 = scmp.ne.s32.totalorder %s67, %s83
    %p85 = scmp.eq.s32.totalorder %s17, 0
    %p86 = por %p84, %p85
    %s88 = sadd.s32 %s87, 1
    %p91 = scmp.eq.s32.totalorder %s11, 1
    %p92 = scmp.ne.s32.totalorder %s87, %s89
    %p93 = scmp.eq.s32.totalorder %s11, 0
    %p94 = por %p92, %p93
    %p95 = scmp.ne.s32.totalorder %s87, %s89
    %p96 = scmp.eq.s32.totalorder %s16, 1
    %p97 = por %p95, %p96
    %p98 = scmp.ne.s32.totalorder %s89, %s90
    %p99 = scmp.eq.s32.totalorder %s16, 0
    %p100 = por %p98, %p99
    %p101 = scmp.ne.s32.totalorder %s89, %s90
    %p102 = scmp.eq.s32.totalorder %s17, 1
    %p103 = por %p101, %p102
    %p105 = scmp.ne.s32.totalorder %s90, %s104
    %p106 = scmp.eq.s32.totalorder %s17, 0
    %p107 = por %p105, %p106
    %s109 = sadd.s32 %s108, 1
    %p112 = scmp.eq.s32.totalorder %s11, 1
    %p113 = scmp.ne.s32.totalorder %s108, %s110
    %p114 = scmp.eq.s32.totalorder %s11, 0
    %p115 = por %p113, %p114
    %p116 = scmp.ne.s32.totalorder %s108, %s110
    %p117 = scmp.eq.s32.totalorder %s16, 1
    %p118 = por %p116, %p117
    %p119 = scmp.ne.s32.totalorder %s110, %s111
    %p120 = scmp.eq.s32.totalorder %s16, 0
    %p121 = por %p119, %p120
    %p122 = scmp.ne.s32.totalorder %s110, %s111
    %p123 = scmp.eq.s32.totalorder %s17, 1
    %p124 = por %p122, %p123
    %p126 = scmp.ne.s32.totalorder %s111, %s125
    %p127 = scmp.eq.s32.totalorder %s17, 0
    %p128 = por %p126, %p127
    %s130 = sadd.s32 %s129, 1
    %p133 = scmp.eq.s32.totalorder %s11, 1
    %p134 = scmp.ne.s32.totalorder %s129, %s131
    %p135 = scmp.eq.s32.totalorder %s11, 0
    %p136 = por %p134, %p135
    %p137 = scmp.ne.s32.totalorder %s129, %s131
    %p138 = scmp.eq.s32.totalorder %s16, 1
    %p139 = por %p137, %p138
    %p140 = scmp.ne.s32.totalorder %s131, %s132
    %p141 = scmp.eq.s32.totalorder %s16, 0
    %p142 = por %p140, %p141
    %p143 = scmp.ne.s32.totalorder %s131, %s132
    %p144 = scmp.eq.s32.totalorder %s17, 1
    %p145 = por %p143, %p144
    %p147 = scmp.ne.s32.totalorder %s132, %s146
    %p148 = scmp.eq.s32.totalorder %s17, 0
    %p149 = por %p147, %p148
    %s150 = ssub.s32 %s18, %s30
    %s151 = ssub.s32 %s19, %s26
    %s152 = sor.u32 %s150, %s151
    %p153 = scmp.eq.s32.totalorder %s152, 0
    %s155 = sadd.s32 %s154, 1
    %s156 = scalar_select %p153, %s154, %s155
    %p159 = pneg %p153
    %p160 = scmp.eq.s32.totalorder %s11, 1
    %p161 = por %p159, %p160
    %p162 = scmp.ne.s32.totalorder %s154, %s157
    %p163 = scmp.eq.s32.totalorder %s11, 0
    %p164 = por %p162, %p163
    %p165 = scmp.ne.s32.totalorder %s154, %s157
    %p166 = scmp.eq.s32.totalorder %s16, 1
    %p167 = por %p165, %p166
    %p168 = scmp.ne.s32.totalorder %s157, %s158
    %p169 = scmp.eq.s32.totalorder %s16, 0
    %p170 = por %p168, %p169
    %p171 = scmp.ne.s32.totalorder %s157, %s158
    %p172 = scmp.eq.s32.totalorder %s17, 1
    %p173 = por %p171, %p172
    %p175 = scmp.ne.s32.totalorder %s158, %s174
    %p176 = scmp.eq.s32.totalorder %s17, 0
    %p177 = por %p175, %p176
    %p178 = scmp.le.s32.totalorder 1, %s11
    %p179 = scmp.lt.s32.totalorder %s11, 3
    %p180 = pnand %p178, %p179
    %p181 = pneg %p180
    // Predicated region
    $region9: #{attention_gate.1} parent=5 // pred_check
      _
    $region10: #{attention_gate.1} parent=5 // pred_check_branch
      %183 = sbr.rel (%p180) target = $region12
    $region11: #{attention_gate.1} parent=5 // pred_region
      %s184 = ssub.s32 %s11, 1
      // Predicated region
      $region13: #{attention_gate.1} parent=11 // pred_check
        %p185 = pneg %p100
      $region14: #{attention_gate.1} parent=11 // pred_check_branch
        %187 = sbr.rel (%p185) target = $region16
      $region15: #{attention_gate.1} parent=11 // pred_region
        _
      $region16: #{attention_gate.1} parent=11 // pred_fallthru
        _
      // Predicated region
      $region17: #{attention_gate.1} parent=11 // pred_check
        %p188 = pneg %p121
      $region18: #{attention_gate.1} parent=11 // pred_check_branch
        %190 = sbr.rel (%p188) target = $region20
      $region19: #{attention_gate.1} parent=11 // pred_region
        _
      $region20: #{attention_gate.1} parent=11 // pred_fallthru
        _
      // Predicated region
      $region21: #{attention_gate.1} parent=11 // pred_check
        %p191 = pneg %p142
      $region22: #{attention_gate.1} parent=11 // pred_check_branch
        %193 = sbr.rel (%p191) target = $region24
      $region23: #{attention_gate.1} parent=11 // pred_region
        _
      $region24: #{attention_gate.1} parent=11 // pred_fallthru
        _
    $region12: #{attention_gate.1} parent=5 // pred_fallthru
      _
    %p194 = scmp.lt.s32.totalorder %s11, 2
    // Predicated region
    $region25: #{attention_gate.1} parent=5 // pred_check
      %p195 = pneg %p194
    $region26: #{attention_gate.1} parent=5 // pred_check_branch
      %197 = sbr.rel (%p195) target = $region28
    $region27: #{attention_gate.1} parent=5 // pred_region
      // Predicated region
      $region29: #{attention_gate.1} parent=27 // pred_check
        %p198 = pneg %p45
      $region30: #{attention_gate.1} parent=27 // pred_check_branch
        %200 = sbr.rel (%p198) target = $region32
      $region31: #{attention_gate.1} parent=27 // pred_region
        %s201 = smul.u32 2, %s19
        %p202 = scmp.lt.s32.totalorder %s18, 1
        %s203 = scalar_select %p202, %s18, 1
        %p204 = scmp.lt.s32.totalorder %s201, 1
        %s205 = scalar_select %p204, %s201, 1
        %s206 = smul.addr %s203, 2
        %s207 = sadd.s32 %s205, %s206
        %s208 = smul.addr %s207, 4
        %s209 = scalar_lea.vmem %s0, %s208
        %s210 = smul.u32 2, %s19
      $region32: #{attention_gate.1} parent=27 // pred_fallthru
        _
      // Predicated region
      $region33: #{attention_gate.1} parent=27 // pred_check
        %p211 = pneg %p73
      $region34: #{attention_gate.1} parent=27 // pred_check_branch
        %213 = sbr.rel (%p211) target = $region36
      $region35: #{attention_gate.1} parent=27 // pred_region
        %s214 = smul.u32 2, %s19
        %p215 = scmp.lt.s32.totalorder %s18, 1
        %s216 = scalar_select %p215, %s18, 1
        %p217 = scmp.lt.s32.totalorder %s214, 1
        %s218 = scalar_select %p217, %s214, 1
        %s219 = smul.addr %s216, 2
        %s220 = sadd.s32 %s218, %s219
        %s221 = smul.addr %s220, 4
        %s222 = scalar_lea.vmem %s1, %s221
        %s223 = smul.u32 2, %s19
      $region36: #{attention_gate.1} parent=27 // pred_fallthru
        _
    $region28: #{attention_gate.1} parent=5 // pred_fallthru
      _
    %p224 = scmp.le.s32.totalorder 1, %s11
    %p225 = scmp.lt.s32.totalorder %s11, 3
    %p226 = pnand %p224, %p225
    %p227 = pneg %p226
    // Predicated region
    $region37: #{attention_gate.1} parent=5 // pred_check
      _
    $region38: #{attention_gate.1} parent=5 // pred_check_branch
      %229 = sbr.rel (%p226) target = $region40
    $region39: #{attention_gate.1} parent=5 // pred_region
      %s230 = ssub.s32 %s11, 1
      %s231 = smul.u32 2, %s21
      %p232 = scmp.lt.s32.totalorder %s20, 1
      %s233 = scalar_select %p232, %s20, 1
      %p234 = scmp.lt.s32.totalorder %s231, 1
      %s235 = scalar_select %p234, %s231, 1
      %s236 = smul.addr %s233, 2
      %s237 = sadd.s32 %s235, %s236
      %s238 = smul.addr %s237, 4
      %s239 = scalar_lea.vmem %s0, %s238
      %p240 = pneg %p51
      %p241 = pneg %p48
      %s242 = smul.u32 2, %s21
      %p243 = scmp.lt.s32.totalorder %s20, 1
      %s244 = scalar_select %p243, %s20, 1
      %p245 = scmp.lt.s32.totalorder %s242, 1
      %s246 = scalar_select %p245, %s242, 1
      %s247 = smul.addr %s244, 2
      %s248 = sadd.s32 %s246, %s247
      %s249 = smul.addr %s248, 4
      %s250 = scalar_lea.vmem %s1, %s249
      %p251 = pneg %p79
      %p252 = pneg %p76
      %p253 = pneg %p100
      %p254 = pneg %p97
      %p255 = pneg %p121
      %p256 = pneg %p118
      %p257 = pneg %p142
      %p258 = pneg %p139
      %p259 = pneg %p170
      %p260 = pneg %p167
      %s261 = smul.u32 2, %s21
      %p262 = scmp.lt.s32.totalorder %s20, 1
      %s263 = scalar_select %p262, %s20, 1
      %p264 = scmp.lt.s32.totalorder %s261, 1
      %s265 = scalar_select %p264, %s261, 1
      %s266 = smul.addr %s263, 2
      %s267 = sadd.s32 %s265, %s266
      %s268 = smul.addr %s267, 4
      %s269 = scalar_lea.vmem %s5, %s268
      %s270 = smul.u32 2, %s21
      %p271 = scmp.lt.s32.totalorder %s20, 1
      %s272 = scalar_select %p271, %s20, 1
      %p273 = scmp.lt.s32.totalorder %s270, 1
      %s274 = scalar_select %p273, %s270, 1
      %s275 = smul.addr %s272, 2
      %s276 = sadd.s32 %s274, %s275
      %s277 = smul.addr %s276, 4
      %s278 = scalar_lea.vmem %s0, %s277
      %s279 = smul.u32 2, %s21
      %s280 = smul.u32 2, %s21
      %p281 = scmp.lt.s32.totalorder %s20, 1
      %s282 = scalar_select %p281, %s20, 1
      %p283 = scmp.lt.s32.totalorder %s280, 1
      %s284 = scalar_select %p283, %s280, 1
      %s285 = smul.addr %s282, 2
      %s286 = sadd.s32 %s284, %s285
      %s287 = smul.addr %s286, 4
      %s288 = scalar_lea.vmem %s1, %s287
      %s289 = smul.u32 2, %s21
      %s290 = smul.u32 2, %s21
      %p291 = scmp.lt.s32.totalorder %s20, 1
      %s292 = scalar_select %p291, %s20, 1
      %p293 = scmp.lt.s32.totalorder %s290, 1
      %s294 = scalar_select %p293, %s290, 1
      %s295 = smul.addr %s292, 2
      %s296 = sadd.s32 %s294, %s295
      %s297 = smul.addr %s296, 4
      %s298 = scalar_lea.vmem %s5, %s297
      %s299 = smul.u32 2, %s21
      %v300 = vld [vmem:[%s2] sm:$0xff]
      %v301 = vld [vmem:[%s3] sm:$0xff]
      %v302 = vld [vmem:[%s4] sm:$0x1]
      %v303 = vld [vmem:[%s278] sm:$0xff]
      %v304 = vld [vmem:[%s288] sm:$0xff]
      %v306 = vcombine.high %v304, %v304
      %vm307 = vcmask 31744
      %v309 = vsel %vm307, %v301, 0
      %vm311 = vcmask 1043456
      %v312 = vsel %vm311, %v304, 0
      %v314 = vsel %vm311, %v306, 0
      %316 = vmatprep.subr.mxu0 0.0
      %317 = vmatpush1.msra.mxu0 0.0
      %318 = vmatprep.subr.mxu0 0.0
      %319 = vmatpush1.msra.mxu0 0.0
      %320 = vmatprep.subr.mxu0 0.0
      %321 = vmatpush1.msra.mxu0 0.0
      %322 = vmatprep.subr.mxu0 0.0
      %323 = vmatpush1.msra.mxu0 0.0
      %324 = vmatprep.subr.mxu0 0.0
      %325 = vmatpush1.msra.mxu0 0.0
      %326 = vmatprep.subr.mxu0 0.0
      %327 = vmatpush1.msra.mxu0 0.0
      %328 = vmatprep.subr.mxu0 0.0
      %329 = vmatpush1.msra.mxu0 0.0
      %330 = vmatprep.subr.mxu0 0.0
      %331 = vmatpush1.msra.mxu0 0.0
      %332 = vmatprep.subr.mxu0 0.0
      %333 = vmatpush1.msra.mxu0 0.0
      %334 = vmatprep.subr.mxu0 0.0
      %335 = vmatpush1.msra.mxu0 0.0
      %336 = vmatprep.subr.mxu0 0.0
      %337 = vmatpush1.msra.mxu0 0.0
      %338 = vmatprep.subr.mxu0 0.0
      %339 = vmatpush1.msra.mxu0 0.0
      %340 = vmatprep.subr.mxu0 0.0
      %341 = vmatpush1.msra.mxu0 0.0
      %342 = vmatprep.subr.mxu0 0.0
      %343 = vmatpush1.msra.mxu0 0.0
      %344 = vmatprep.subr.mxu0 0.0
      %345 = vmatpush1.msra.mxu0 0.0
      %346 = vmatprep.subr.mxu0 %v314
      %347 = vmatpush1.msra.mxu0 %v312
      %348 = vmatprep.subr.mxu0 0.0
      %349 = vmatpush2.msra.mxu0 0.0
      %350 = vmatprep.subr.mxu0 0.0
      %351 = vmatpush2.msra.mxu0 0.0
      %352 = vmatprep.subr.mxu0 0.0
      %353 = vmatpush2.msra.mxu0 0.0
      %354 = vmatprep.subr.mxu0 0.0
      %355 = vmatpush2.msra.mxu0 0.0
      %356 = vmatprep.subr.mxu0 0.0
      %357 = vmatpush2.msra.mxu0 0.0
      %358 = vmatprep.subr.mxu0 0.0
      %359 = vmatpush2.msra.mxu0 0.0
      %360 = vmatprep.subr.mxu0 0.0
      %361 = vmatpush2.msra.mxu0 0.0
      %362 = vmatprep.subr.mxu0 0.0
      %363 = vmatpush2.msra.mxu0 0.0
      %364 = vmatprep.subr.mxu0 0.0
      %365 = vmatpush2.msra.mxu0 0.0
      %366 = vmatprep.subr.mxu0 0.0
      %367 = vmatpush2.msra.mxu0 0.0
      %368 = vmatprep.subr.mxu0 0.0
      %369 = vmatpush2.msra.mxu0 0.0
      %370 = vmatprep.subr.mxu0 0.0
      %371 = vmatpush2.msra.mxu0 0.0
      %372 = vmatprep.subr.mxu0 0.0
      %373 = vmatpush2.msra.mxu0 0.0
      %374 = vmatprep.subr.mxu0 0.0
      %375 = vmatpush2.msra.mxu0 0.0
      %376 = vmatprep.subr.mxu0 0.0
      %377 = vmatpush2.msra.mxu0 0.0
      %378 = vmatprep.subr.mxu0 0.0
      %379 = vmatpush2.msra.mxu0 0.0
      %380 = vmatprep.mubr.f32.mxu0 0.0
      %381 = vmatmul.mubr.f32.gmra.mxu0 %v309
      %v382 = vpop.f32.mrf.mxu0
      %v383 = vadd.f32 0.0, %v382
      %v384 = vpop.f32.mrf.mxu0
      %v385 = vadd.f32 0.0, %v384
      %386 = vdwg.mxu0
      %v388 = vcombine.high %v303, %v303
      %v390 = vsel %vm307, %v300, 0
      %v392 = vsel %vm311, %v303, 0
      %v394 = vsel %vm311, %v388, 0
      %396 = vmatprep.subr.mxu0 0.0
      %397 = vmatpush1.msra.mxu0 0.0
      %398 = vmatprep.subr.mxu0 0.0
      %399 = vmatpush1.msra.mxu0 0.0
      %400 = vmatprep.subr.mxu0 0.0
      %401 = vmatpush1.msra.mxu0 0.0
      %402 = vmatprep.subr.mxu0 0.0
      %403 = vmatpush1.msra.mxu0 0.0
      %404 = vmatprep.subr.mxu0 0.0
      %405 = vmatpush1.msra.mxu0 0.0
      %406 = vmatprep.subr.mxu0 0.0
      %407 = vmatpush1.msra.mxu0 0.0
      %408 = vmatprep.subr.mxu0 0.0
      %409 = vmatpush1.msra.mxu0 0.0
      %410 = vmatprep.subr.mxu0 0.0
      %411 = vmatpush1.msra.mxu0 0.0
      %412 = vmatprep.subr.mxu0 0.0
      %413 = vmatpush1.msra.mxu0 0.0
      %414 = vmatprep.subr.mxu0 0.0
      %415 = vmatpush1.msra.mxu0 0.0
      %416 = vmatprep.subr.mxu0 0.0
      %417 = vmatpush1.msra.mxu0 0.0
      %418 = vmatprep.subr.mxu0 0.0
      %419 = vmatpush1.msra.mxu0 0.0
      %420 = vmatprep.subr.mxu0 0.0
      %421 = vmatpush1.msra.mxu0 0.0
      %422 = vmatprep.subr.mxu0 0.0
      %423 = vmatpush1.msra.mxu0 0.0
      %424 = vmatprep.subr.mxu0 0.0
      %425 = vmatpush1.msra.mxu0 0.0
      %426 = vmatprep.subr.mxu0 %v394
      %427 = vmatpush1.msra.mxu0 %v392
      %428 = vmatprep.subr.mxu0 0.0
      %429 = vmatpush2.msra.mxu0 0.0
      %430 = vmatprep.subr.mxu0 0.0
      %431 = vmatpush2.msra.mxu0 0.0
      %432 = vmatprep.subr.mxu0 0.0
      %433 = vmatpush2.msra.mxu0 0.0
      %434 = vmatprep.subr.mxu0 0.0
      %435 = vmatpush2.msra.mxu0 0.0
      %436 = vmatprep.subr.mxu0 0.0
      %437 = vmatpush2.msra.mxu0 0.0
      %438 = vmatprep.subr.mxu0 0.0
      %439 = vmatpush2.msra.mxu0 0.0
      %440 = vmatprep.subr.mxu0 0.0
      %441 = vmatpush2.msra.mxu0 0.0
      %442 = vmatprep.subr.mxu0 0.0
      %443 = vmatpush2.msra.mxu0 0.0
      %444 = vmatprep.subr.mxu0 0.0
      %445 = vmatpush2.msra.mxu0 0.0
      %446 = vmatprep.subr.mxu0 0.0
      %447 = vmatpush2.msra.mxu0 0.0
      %448 = vmatprep.subr.mxu0 0.0
      %449 = vmatpush2.msra.mxu0 0.0
      %450 = vmatprep.subr.mxu0 0.0
      %451 = vmatpush2.msra.mxu0 0.0
      %452 = vmatprep.subr.mxu0 0.0
      %453 = vmatpush2.msra.mxu0 0.0
      %454 = vmatprep.subr.mxu0 0.0
      %455 = vmatpush2.msra.mxu0 0.0
      %456 = vmatprep.subr.mxu0 0.0
      %457 = vmatpush2.msra.mxu0 0.0
      %458 = vmatprep.subr.mxu0 0.0
      %459 = vmatpush2.msra.mxu0 0.0
      %460 = vmatprep.mubr.f32.mxu0 0.0
      %461 = vmatmul.mubr.f32.gmra.mxu0 %v390
      %v462 = vpop.f32.mrf.mxu0
      %v463 = vadd.f32 %v383, %v462
      %v464 = vpop.f32.mrf.mxu0
      %v465 = vadd.f32 %v385, %v464
      %466 = vdwg.mxu0
      %v467 = vmax.f32 %v463, 0.0
      %v468 = vmax.f32 %v465, 0.0
      %vm469 = vcmask 64512
      %v471 = vsel %vm469, %v302, 0
      %473 = vmatprep.subr.mxu0 0.0
      %474 = vmatpush1.msra.mxu0 0.0
      %475 = vmatprep.subr.mxu0 0.0
      %476 = vmatpush1.msra.mxu0 0.0
      %477 = vmatprep.subr.mxu0 0.0
      %478 = vmatpush1.msra.mxu0 0.0
      %479 = vmatprep.subr.mxu0 0.0
      %480 = vmatpush1.msra.mxu0 0.0
      %481 = vmatprep.subr.mxu0 0.0
      %482 = vmatpush1.msra.mxu0 0.0
      %483 = vmatprep.subr.mxu0 0.0
      %484 = vmatpush1.msra.mxu0 0.0
      %485 = vmatprep.subr.mxu0 0.0
      %486 = vmatpush1.msra.mxu0 0.0
      %487 = vmatprep.subr.mxu0 0.0
      %488 = vmatpush1.msra.mxu0 0.0
      %489 = vmatprep.subr.mxu0 0.0
      %490 = vmatpush1.msra.mxu0 0.0
      %491 = vmatprep.subr.mxu0 0.0
      %492 = vmatpush1.msra.mxu0 0.0
      %493 = vmatprep.subr.mxu0 0.0
      %494 = vmatpush1.msra.mxu0 0.0
      %495 = vmatprep.subr.mxu0 0.0
      %496 = vmatpush1.msra.mxu0 0.0
      %497 = vmatprep.subr.mxu0 0.0
      %498 = vmatpush1.msra.mxu0 0.0
      %499 = vmatprep.subr.mxu0 0.0
      %500 = vmatpush1.msra.mxu0 0.0
      %501 = vmatprep.subr.mxu0 0.0
      %502 = vmatpush1.msra.mxu0 0.0
      %503 = vmatprep.subr.mxu0 %v468
      %504 = vmatpush1.msra.mxu0 %v467
      %505 = vmatprep.subr.mxu0 0.0
      %506 = vmatpush2.msra.mxu0 0.0
      %507 = vmatprep.subr.mxu0 0.0
      %508 = vmatpush2.msra.mxu0 0.0
      %509 = vmatprep.subr.mxu0 0.0
      %510 = vmatpush2.msra.mxu0 0.0
      %511 = vmatprep.subr.mxu0 0.0
      %512 = vmatpush2.msra.mxu0 0.0
      %513 = vmatprep.subr.mxu0 0.0
      %514 = vmatpush2.msra.mxu0 0.0
      %515 = vmatprep.subr.mxu0 0.0
      %516 = vmatpush2.msra.mxu0 0.0
      %517 = vmatprep.subr.mxu0 0.0
      %518 = vmatpush2.msra.mxu0 0.0
      %519 = vmatprep.subr.mxu0 0.0
      %520 = vmatpush2.msra.mxu0 0.0
      %521 = vmatprep.subr.mxu0 0.0
      %522 = vmatpush2.msra.mxu0 0.0
      %523 = vmatprep.subr.mxu0 0.0
      %524 = vmatpush2.msra.mxu0 0.0
      %525 = vmatprep.subr.mxu0 0.0
      %526 = vmatpush2.msra.mxu0 0.0
      %527 = vmatprep.subr.mxu0 0.0
      %528 = vmatpush2.msra.mxu0 0.0
      %529 = vmatprep.subr.mxu0 0.0
      %530 = vmatpush2.msra.mxu0 0.0
      %531 = vmatprep.subr.mxu0 0.0
      %532 = vmatpush2.msra.mxu0 0.0
      %533 = vmatprep.subr.mxu0 0.0
      %534 = vmatpush2.msra.mxu0 0.0
      %535 = vmatprep.subr.mxu0 0.0
      %536 = vmatpush2.msra.mxu0 0.0
      %537 = vmatprep.mubr.f32.mxu0 0.0
      %538 = vmatmul.mubr.f32.gmra.mxu0 %v471
      %v539 = vpop.f32.mrf.mxu0
      %v540 = vadd.f32 0.0, %v539
      %v541 = vpop.f32.mrf.mxu0
      %v542 = vadd.f32 0.0, %v541
      %543 = vdwg.mxu0
      %v544 = vxor.u32 %v540, 2147483648
      %v545 = vxor.u32 %v542, 2147483648
      %v546 = vmul.f32 %v544, 1.442695
      %v547 = vpow.pop %v546
      %v548 = vmul.f32 %v545, 1.442695
      %v549 = vpow.pop %v548
      %v550 = vadd.f32 %v547, 1.0
      %v551 = vadd.f32 %v549, 1.0
      %v552 = vrcp.pop %v550
      %v553 = vmul.f32 1.0, %v552
      %v554 = vrcp.pop %v551
      %v555 = vmul.f32 1.0, %v554
      %v556 = vlaneseq
      %v557 = vshrl.u32 %v556, 7
      %v558 = vsub.s32 0, %v557
      %v559 = vrot.slane %v553, %v558
      %v560 = vlaneseq
      %v561 = vshrl.u32 %v560, 7
      %v562 = vsub.s32 0, %v561
      %v563 = vrot.slane %v555, %v562
      %v566 = vcombine.low %v559, %v563
      %v568 = vmul.f32 %v304, %v566
      %569 = vst [vmem:[%s298] sm:$0xff] %v568
      %s570 = smul.u32 2, %s21
      %p571 = scmp.lt.s32.totalorder %s20, 1
      %s572 = scalar_select %p571, %s20, 1
      %p573 = scmp.lt.s32.totalorder %s570, 1
      %s574 = scalar_select %p573, %s570, 1
      %s575 = smul.addr %s572, 2
      %s576 = sadd.s32 %s574, %s575
      %s577 = smul.addr %s576, 4
      %s578 = scalar_lea.vmem %s5, %s577
      // Predicated region
      $region41: #{attention_gate.1} parent=39 // pred_check
        %p579 = pneg %p167
      $region42: #{attention_gate.1} parent=39 // pred_check_branch
        %581 = sbr.rel (%p579) target = $region44
      $region43: #{attention_gate.1} parent=39 // pred_region
        %s582 = smul.u32 2, %s21
      $region44: #{attention_gate.1} parent=39 // pred_fallthru
        _
    $region40: #{attention_gate.1} parent=5 // pred_fallthru
      _
    %p583 = scmp.le.s32.totalorder 2, %s11
    // Predicated region
    $region45: #{attention_gate.1} parent=5 // pred_check
      %p584 = pneg %p583
    $region46: #{attention_gate.1} parent=5 // pred_check_branch
      %586 = sbr.rel (%p584) target = $region48
    $region47: #{attention_gate.1} parent=5 // pred_region
      %s587 = ssub.s32 %s11, 2
      // Predicated region
      $region49: #{attention_gate.1} parent=47 // pred_check
        %p588 = pneg %p173
      $region50: #{attention_gate.1} parent=47 // pred_check_branch
        %590 = sbr.rel (%p588) target = $region52
      $region51: #{attention_gate.1} parent=47 // pred_region
        %s591 = smul.u32 2, %s23
        %p592 = scmp.lt.s32.totalorder %s22, 1
        %s593 = scalar_select %p592, %s22, 1
        %p594 = scmp.lt.s32.totalorder %s591, 1
        %s595 = scalar_select %p594, %s591, 1
        %s596 = smul.addr %s593, 2
        %s597 = sadd.s32 %s595, %s596
        %s598 = smul.addr %s597, 4
        %s599 = scalar_lea.vmem %s5, %s598
      $region52: #{attention_gate.1} parent=47 // pred_fallthru
        _
    $region48: #{attention_gate.1} parent=5 // pred_fallthru
      _
  $region6: #{attention_gate.1} parent=0 // loop_footer
    %s15 = sadd.s32 1, %s11
  $region7: #{attention_gate.1} parent=0 // loop_footer_branch
    %10 = sbr.rel target = $region3
  $region8: #{attention_gate.1} parent=0 // loop_exit
    _

</llo_original>
